<compile_context>
chip_gen: v5e
topology: v5e:2x2
jax: 0.10.0
libtpu: 0.0.40
codegen_flags: <defaults>
</compile_context>

<pallas_src>
import jax
import jax.numpy as jnp
from jax.experimental import pallas as pl
from jax.experimental.pallas import tpu as pltpu


def collapse_params(w1, b1, w2, b2, w3, b3):
    """Fold the three activation-free Linears into one affine map (done once).

    PyTorch semantics:  lin = ((x @ W1.T + b1) @ W2.T + b2) @ W3.T + b3
                 =>     lin = x @ (W1.T @ W2.T @ W3.T) + ((b1 @ W2.T + b2) @ W3.T + b3)

    Returns (w_row [1, 28], bias [1, 1]); hoisted out of the per-call path.
    """
    w_eff = w1.T @ w2.T @ w3.T                    # [28, 1]
    b_eff = (b1 @ w2.T + b2) @ w3.T + b3          # [1]
    return w_eff.T, b_eff.reshape(1, 1)


def _fused_kernel(x_ref, w_ref, b_ref, out_ref):
    # x_ref:   [TB, 28]  batch tile (batch on sublanes, features on lanes)
    # w_ref:   [1, 28]   collapsed weight row (resident across the whole grid)
    # b_ref:   [1, 1]    collapsed bias, SMEM scalar
    # out_ref: [2, TB]   row 0 = sigmoid head, row 1 = linear head
    #
    # Contract the feature dim of both operands -> [1, TB]: batch lands on the
    # lane axis, so the fused output block is lane-dense (no vst.msk on lanes).
    lin = jax.lax.dot_general(
        w_ref[...], x_ref[...],
        dimension_numbers=(((1,), (1,)), ((), ())),
        preferred_element_type=jnp.float32,
    ) + b_ref[0, 0]                                   # [1, TB]
    sf = 1.0 / (1.0 + jnp.exp(-lin))                  # exp on EUP; exact sigmoid
    # Two row-writes into the SAME output block -> still a single write-back
    # DMA per grid step (the win over two separate [1, TB] outputs).
    out_ref[0:1, :] = sf
    out_ref[1:2, :] = lin


def _pick_batch_tile(B):
    """Batch-tile size.

    - B <= 512: one block. The grid is a serial loop on a TensorCore and each
      step costs ~0.35 us fixed overhead; for this latency-dominated microkernel
      a single block is fastest on 1-TC parts (v5e/v6e) and harmless on v7x.
    - B > 512: at least two tiles so dimension_semantics=("parallel",) can
      shard the batch across v7x's two TensorCores; each tile a multiple of
      128 lanes, capped at 4096 (padded VMEM footprint stays at a few MiB).
    """
    if B <= 512:
        return B
    half = (B + 1) // 2
    tb = ((half + 127) // 128) * 128
    return min(tb, 4096)


@jax.jit
def network_forward(x, w_row, bias11):
    """x: [B, 28] f32. Returns (sigmoid_out [B, 1], linear_out [B, 1])."""
    B, F = x.shape
    TB = _pick_batch_tile(B)
    grid = (pl.cdiv(B, TB),)

    fused = pl.pallas_call(
        _fused_kernel,
        out_shape=jax.ShapeDtypeStruct((2, B), jnp.float32),
        grid=grid,
        in_specs=[
            pl.BlockSpec((TB, F), lambda i: (i, 0)),                 # x batch tile
            pl.BlockSpec((1, F), lambda i: (0, 0)),                  # weight row, stays resident
            pl.BlockSpec((1, 1), lambda i: (0, 0),
                         memory_space=pltpu.MemorySpace.SMEM),       # bias scalar
        ],
        # Sublane dim 2 equals the full array dim (always legal); lane dim TB is
        # either the full dim (single block) or a multiple of 128.
        out_specs=pl.BlockSpec((2, TB), lambda i: (0, i)),
        compiler_params=pltpu.CompilerParams(
            dimension_semantics=("parallel",),   # batch tiles shard across TCs on v7x
        ),
        cost_estimate=pl.CostEstimate(
            flops=2 * B * F + 6 * B,
            transcendentals=B,
            bytes_accessed=4 * (B * F + F + 1 + 2 * B),
        ),
    )(x, w_row, bias11)

    # Row views + [1, B] -> [B, 1] reshapes are free (same row-major order).
    sf_out = fused[0].reshape(B, 1)
    lin_out = fused[1].reshape(B, 1)
    return sf_out, lin_out


def _init_linear(key, in_f, out_f):
    """Deterministic init matching nn.Linear shapes: W [out, in], b [out]."""
    kw, kb = jax.random.split(key)
    bound = 1.0 / jnp.sqrt(in_f)
    w = jax.random.uniform(kw, (out_f, in_f), jnp.float32, -bound, bound)
    b = jax.random.uniform(kb, (out_f,), jnp.float32, -bound, bound)
    return w, b


def _reference(x, w1, b1, w2, b2, w3, b3):
    # Layer-by-layer reference matching the PyTorch forward exactly.
    h1 = x @ w1.T + b1
    h2 = h1 @ w2.T + b2
    lin = h2 @ w3.T + b3
    return jax.nn.sigmoid(lin), lin


if __name__ == "__main__":
    key = jax.random.PRNGKey(0)
    kx, k1, k2, k3 = jax.random.split(key, 4)

    w1, b1 = _init_linear(k1, 28, 20)   # shared_layer1
    w2, b2 = _init_linear(k2, 20, 10)   # shared_layer2
    w3, b3 = _init_linear(k3, 10, 1)    # linear_output (shared by both heads)

    # Collapse the affine stack once, outside the per-call path.
    w_row, bias11 = jax.block_until_ready(collapse_params(w1, b1, w2, b2, w3, b3))

    # Small single-block case + a 2-tile grid with a partial last tile
    # (exercises the masked write-back path flagged in the review).
    for B in (8, 1500):
        x = jax.random.normal(kx, (B, 28), jnp.float32)
        sf_out, lin_out = jax.block_until_ready(network_forward(x, w_row, bias11))

        ref_sf, ref_lin = _reference(x, w1, b1, w2, b2, w3, b3)
        assert sf_out.shape == (B, 1) and lin_out.shape == (B, 1)
        assert jnp.allclose(lin_out, ref_lin, atol=1e-5), "linear head mismatch"
        assert jnp.allclose(sf_out, ref_sf, atol=1e-5), "sigmoid head mismatch"

    print("KERNEL_OK")
</pallas_src>

<mosaic_0001>
module attributes {stable_mosaic.version = 11 : i64} {
  func.func @_fused_kernel(%arg0: i32, %arg1: memref<8x28xf32, #tpu.memory_space<vmem>>, %arg2: memref<1x28xf32, #tpu.memory_space<vmem>>, %arg3: memref<1x1xf32, #tpu.memory_space<smem>>, %arg4: memref<2x8xf32, #tpu.memory_space<vmem>>) attributes {dimension_semantics = [#tpu.dimension_semantics<parallel>], iteration_bounds = array<i64: 1>, scalar_prefetch = 0 : i64, scratch_operands = 0 : i64, tpu.core_type = #tpu.core_type<tc>, window_params = [{transform_indices = @transform_0, window_bounds = array<i64: 8, 28>}, {pipeline_mode = #tpu.pipeline_mode<synchronous>, transform_indices = @transform_1, window_bounds = array<i64: 1, 28>}, {transform_indices = @transform_2, window_bounds = array<i64: 1, 1>}, {transform_indices = @transform_3, window_bounds = array<i64: 2, 8>}]} {
    %c0 = arith.constant 0 : index
    %c0_0 = arith.constant 0 : index
    %0 = vector.load %arg2[%c0, %c0_0] : memref<1x28xf32, #tpu.memory_space<vmem>>, vector<1x28xf32>
    %c0_1 = arith.constant 0 : index
    %c0_2 = arith.constant 0 : index
    %1 = vector.load %arg1[%c0_1, %c0_2] : memref<8x28xf32, #tpu.memory_space<vmem>>, vector<8x28xf32>
    %cst = arith.constant dense<0.000000e+00> : vector<1x8xf32>
    %2 = tpu.matmul %0, %1, %cst {dimension_numbers = #tpu.dot_dimension_numbers<[1], [1], [0], [0], [0, 0, 1, 0], [], []>} : vector<1x28xf32>, vector<8x28xf32>, vector<1x8xf32> -> vector<1x8xf32>
    %c0_3 = arith.constant 0 : index
    %c0_4 = arith.constant 0 : index
    %3 = memref.load %arg3[%c0_3, %c0_4] : memref<1x1xf32, #tpu.memory_space<smem>>
    %4 = vector.broadcast %3 : f32 to vector<1x8xf32>
    %5 = arith.addf %2, %4 : vector<1x8xf32>
    %cst_5 = arith.constant 0.000000e+00 : f32
    %6 = vector.broadcast %cst_5 : f32 to vector<1x8xf32>
    %7 = arith.subf %6, %5 : vector<1x8xf32>
    %8 = math.exp %7 : vector<1x8xf32>
    %cst_6 = arith.constant 1.000000e+00 : f32
    %9 = vector.broadcast %cst_6 : f32 to vector<1x8xf32>
    %10 = arith.addf %9, %8 : vector<1x8xf32>
    %cst_7 = arith.constant 1.000000e+00 : f32
    %11 = vector.broadcast %cst_7 : f32 to vector<1x8xf32>
    %12 = arith.divf %11, %10 : vector<1x8xf32>
    %c0_8 = arith.constant 0 : index
    %c0_9 = arith.constant 0 : index
    %13 = vector.load %arg4[%c0_8, %c0_9] : memref<2x8xf32, #tpu.memory_space<vmem>>, vector<1x8xf32>
    tpu.vector_store %arg4[%c0_8, %c0_9], %12 {strides = array<i32>} : memref<2x8xf32, #tpu.memory_space<vmem>>, vector<1x8xf32>,
    %c1 = arith.constant 1 : index
    %c0_10 = arith.constant 0 : index
    %14 = vector.load %arg4[%c1, %c0_10] : memref<2x8xf32, #tpu.memory_space<vmem>>, vector<1x8xf32>
    tpu.vector_store %arg4[%c1, %c0_10], %5 {strides = array<i32>} : memref<2x8xf32, #tpu.memory_space<vmem>>, vector<1x8xf32>,
    return
  }
  func.func @transform_0(%arg0: i32) -> (i32, i32) {
    %c0_i32 = arith.constant 0 : i32
    %c0_i32_0 = arith.constant 0 : i32
    return %arg0, %c0_i32 : i32, i32
  }
  func.func @transform_1(%arg0: i32) -> (i32, i32) {
    %c0_i32 = arith.constant 0 : i32
    %c0_i32_0 = arith.constant 0 : i32
    %c0_i32_1 = arith.constant 0 : i32
    return %c0_i32, %c0_i32_0 : i32, i32
  }
  func.func @transform_2(%arg0: i32) -> (i32, i32) {
    %c0_i32 = arith.constant 0 : i32
    %c0_i32_0 = arith.constant 0 : i32
    %c0_i32_1 = arith.constant 0 : i32
    return %c0_i32, %c0_i32_0 : i32, i32
  }
  func.func @transform_3(%arg0: i32) -> (i32, i32) {
    %c0_i32 = arith.constant 0 : i32
    %c0_i32_0 = arith.constant 0 : i32
    return %c0_i32, %arg0 : i32, i32
  }
}

</mosaic_0001>

<llo_original>
// kernel: network_forward.1
$region0: #{network_forward.1}
  #allocation0 [shape = 'u32[]', space=smem, size = 0x4, offset = 0x4, fixed_abs, tag = 'smem constant byte address 0x4 - core index']
  #allocation1 [shape = 'u32[72,128]{1,0:T(1,128)}', space=vmem, size = 0x9000, scoped, tag = 'internal scratch']
  #allocation2 [shape = 'f32[1,1]{1,0:T(1,128)S(6)}', space=smem, size = 0x200, scoped, tag = 'scoped memory for network_forward.1']
  %s0 = inlined_call_operand.hbm [shape: f32[8,28], index: 0, kind: input, shape index: {}]
  %s1 = inlined_call_operand.vmem [shape: f32[1,28], index: 1, kind: input, shape index: {}]
  %s2 = inlined_call_operand.<no memory space> [shape: f32[1,1], index: 2, kind: input, shape index: {}]
  %s3 = inlined_call_operand.vmem [shape: f32[2,8], index: 3, kind: output, shape index: {}]
  %s4 = sld [smem:[#allocation0]]
  $region26: #{network_forward.1} parent=0
    _
  %s6 = ssub.s32 1, %s4
  %s7 = scalar_select 0, %s6, %s4
  %8 = sst [smem:[#allocation2]] %s2
  $region1: #{network_forward.1} parent=0
    #allocation3 [shape = 'u8[4096]{0}', space=vmem, size = 0x1000, scoped, tag = 'input window, operand 0, single buffered']
    #allocation4 [shape = 's32[1]{0}', space=sflag, size = 0x4, scoped, tag = 'scoped memory for network_forward.1']
    %9 = vsyncpa [#allocation4], 0
    // Predicated region
    $region2: #{network_forward.1} parent=1 // pred_check
      _
    $region3: #{network_forward.1} parent=1 // pred_check_branch
      %11 = sbr.rel (0) target = $region5
    $region4: #{network_forward.1} parent=1 // pred_region
      %13 = vsyncadd [#allocation4], 0
      %s15 = sshll.u32 %s0, 4
      %s16 = int_to_ptr.hbm [resolvable:$true] %s15
      %s17 = sshll.u32 [#allocation3], 4
      %s18 = int_to_ptr.vmem [resolvable:$true] %s17
      %20 = dma.hbm_to_vmem [thread:$0]  %s16, 128, %s18, [#allocation4]
    $region5: #{network_forward.1} parent=1 // pred_fallthru
      _
    // Predicated region
    $region6: #{network_forward.1} parent=1 // pred_check
      _
    $region7: #{network_forward.1} parent=1 // pred_check_branch
      %22 = sbr.rel (0) target = $region9
    $region8: #{network_forward.1} parent=1 // pred_region
      _
    $region9: #{network_forward.1} parent=1 // pred_fallthru
      _
    // Predicated region
    $region10: #{network_forward.1} parent=1 // pred_check
      _
    $region11: #{network_forward.1} parent=1 // pred_check_branch
      %24 = sbr.rel (0) target = $region13
    $region12: #{network_forward.1} parent=1 // pred_region
      _
    $region13: #{network_forward.1} parent=1 // pred_fallthru
      _
    // Predicated region
    $region14: #{network_forward.1} parent=1 // pred_check
      _
    $region15: #{network_forward.1} parent=1 // pred_check_branch
      %26 = sbr.rel (0) target = $region17
    $region16: #{network_forward.1} parent=1 // pred_region
      %28 = dma.done [#allocation4], 128
    $region17: #{network_forward.1} parent=1 // pred_fallthru
      _
    %v29 = vld [vmem:[%s1] sm:$0x1]
    %v30 = vld [vmem:[#allocation3] sm:$0xff]
    %s31 = sld [smem:[#allocation2]]
    %v32 = vstv %s31
    %vm33 = vcmask 228352
    %v35 = vsel %vm33, %v29, 0
    %v38 = vsel %vm33, %v30, 0
    %40 = vmatpush.xpose.msra.mxu0 0.0
    %41 = vmatpush.xpose.msra.mxu0 0.0
    %42 = vmatpush.xpose.msra.mxu0 0.0
    %43 = vmatpush.xpose.msra.mxu0 0.0
    %44 = vmatpush.xpose.msra.mxu0 0.0
    %45 = vmatpush.xpose.msra.mxu0 0.0
    %46 = vmatpush.xpose.msra.mxu0 0.0
    %47 = vmatpush.xpose.msra.mxu0 0.0
    %48 = vmatpush.xpose.msra.mxu0 0.0
    %49 = vmatpush.xpose.msra.mxu0 0.0
    %50 = vmatpush.xpose.msra.mxu0 0.0
    %51 = vmatpush.xpose.msra.mxu0 0.0
    %52 = vmatpush.xpose.msra.mxu0 0.0
    %53 = vmatpush.xpose.msra.mxu0 0.0
    %54 = vmatpush.xpose.msra.mxu0 0.0
    %55 = vmatpush.xpose.msra.mxu0 %v38
    %56 = vmatmul.f32.gmra.mxu0 %v35
    %v57 = vpop.f32.mrf.mxu0
    %v58 = vadd.f32 %v32, %v57
    %59 = vdwg.mxu0
    %v60 = vsub.f32 0.0, %v58
    %v61 = vmul.f32 %v60, 1.442695
    %v62 = vpow.pop %v61
    %v63 = vadd.f32 %v62, 1.0
    %v64 = vrcp.pop %v63
    %v65 = vmul.f32 %v63, %v64
    %v66 = vsub.f32 1.0, %v65
    %v67 = vmul.f32 %v64, %v66
    %v68 = vadd.f32 %v64, %v67
    %vm69 = vweird.f32 %v63
    %vm70 = vweird.f32 %v64
    %vm71 = vmor %vm69, %vm70
    %v72 = vsel %vm71, %v64, %v68
    %v73 = vand.u32 2147483647, %v63
    %vm74 = vcmp.eq.f32.partialorder %v73, 8.507059e+37
    %v75 = vand.u32 %v63, 2147483648
    %v76 = vor.u32 1.1754944e-38, %v75
    %v77 = vsel %vm74, %v76, %v72
    %v78 = vmul.f32 1.0, %v77
    %vm79 = vcmask 57344
    %80 = vst.msk [vmem:[%s3] sm:$0x1] %vm79, %v78
    %81 = vst.msk [vmem:[%s3 + $0x1] sm:$0x1] %vm79, %v58
    // Predicated region
    $region18: #{network_forward.1} parent=1 // pred_check
      _
    $region19: #{network_forward.1} parent=1 // pred_check_branch
      %83 = sbr.rel (0) target = $region21
    $region20: #{network_forward.1} parent=1 // pred_region
      _
    $region21: #{network_forward.1} parent=1 // pred_fallthru
      _
    // Predicated region
    $region22: #{network_forward.1} parent=1 // pred_check
      _
    $region23: #{network_forward.1} parent=1 // pred_check_branch
      %85 = sbr.rel (0) target = $region25
    $region24: #{network_forward.1} parent=1 // pred_region
      _
    $region25: #{network_forward.1} parent=1 // pred_fallthru
      _
    %86 = vsyncpa [#allocation4], 1

</llo_original>
